<compile_context>
chip_gen: v7x
topology: tpu7x:2x2x1
jax: 0.10.0
libtpu: 0.0.40
codegen_flags: <defaults>
</compile_context>

<pallas_src>
import numpy as np
import jax
import jax.numpy as jnp
from jax.experimental import pallas as pl
from jax.experimental.pallas import tpu as pltpu


# ----------------------------- kernel ---------------------------------------


def single_hidden_kernel(x_ref, w1_ref, shift_ref, w2_ref, b2_ref, o_ref, acc_ref):
    # x_ref:     (TB, tk)        f32 flattened-input tile (cast to bf16 in-kernel)
    # w1_ref:    (tk, H_pad)     bf16 linear1 weight block (BN scale folded in)
    # shift_ref: (1, H_pad)      f32 folded BN shift (beta - mean*scale)
    # w2_ref:    (H_pad, C_pad)  bf16 linear2 weight (transposed)
    # b2_ref:    (1, C_pad)      f32 linear2 bias (-1e30 in padded class lanes)
    # o_ref:     (TB, C_pad)     f32 softmax probabilities
    # acc_ref:   (TB, H_pad)     f32 accumulator scratch for linear1
    k = pl.program_id(1)

    @pl.when(k == 0)
    def _():
        acc_ref[...] = jnp.zeros_like(acc_ref)

    # linear1 partial product on the MXU (bf16 operands, f32 accumulation).
    acc_ref[...] += jnp.dot(
        x_ref[...].astype(jnp.bfloat16),
        w1_ref[...],
        preferred_element_type=jnp.float32,
    )

    @pl.when(k == pl.num_programs(1) - 1)
    def _():
        h = acc_ref[...] + shift_ref[...]      # eval-mode BN (scale folded into w1)
        h = jnp.maximum(h, 0.0)                # ReLU; dropout = identity at inference
        logits = jnp.dot(h.astype(jnp.bfloat16), w2_ref[...],
                         preferred_element_type=jnp.float32) + b2_ref[...]
        # Numerically stable softmax over the class dim (padded lanes -> 0).
        m = jnp.max(logits, axis=1, keepdims=True)
        e = jnp.exp(logits - m)
        denom = jnp.sum(e, axis=1, keepdims=True)
        # Exact divide so each row sums to 1 within f32 rounding.
        o_ref[...] = (e / denom).astype(o_ref.dtype)


# ----------------------------- helpers ---------------------------------------


def _round_up(a, b):
    return (a + b - 1) // b * b


def _choose_tk(d_pad, cap=2048):
    """Largest multiple of 128 that divides d_pad and is <= cap."""
    m = d_pad // 128
    best = 1
    d = 1
    while d * d <= m:
        if m % d == 0:
            for cand in (d, m // d):
                if cand * 128 <= cap and cand > best:
                    best = cand
        d += 1
    return best * 128


def _choose_tb(batch, tb_max=512):
    """Batch tile: multiple of 16 (bf16 packing), minimal padding, >=2 tiles
    when the batch allows (so the 'parallel' axis shards across v7x's 2 TCs)."""
    n_tiles = max(1, -(-batch // tb_max))
    if batch >= 32:
        n_tiles = max(n_tiles, 2)
    return _round_up(-(-batch // n_tiles), 16)


def _vmem_limit_bytes(tb, tk, h_pad, c_pad):
    x_tile = tb * tk * 4           # f32 x tile (double-buffered)
    w1_tile = tk * h_pad * 2       # bf16 w1 block (double-buffered)
    out_tile = tb * c_pad * 4
    resident = h_pad * 4 + h_pad * c_pad * 2 + c_pad * 4   # shift + w2 + b2
    acc = tb * h_pad * 4
    need = 2 * (x_tile + w1_tile + out_tile) + 2 * resident + acc
    budget = int(need * 1.5) + (4 << 20)
    # Cap at 56 MiB so the request also fits v7x's 64 MiB/TC; v5e/v6e (128 MiB)
    # could go higher for very large H if a sweep shows it helps.
    return max(24 << 20, min(budget, 56 << 20))


# ----------------------------- params ----------------------------------------


def init_params(input_shape, hidden_dim, n_class, key):
    """Deterministic synthetic parameters matching SingleHidden(bn=True) shapes."""
    D = int(np.prod(input_shape))
    k1, k2, k3, k4, k5, k6 = jax.random.split(key, 6)
    # Linear1: weight (hidden, D), bias=False (bn=True). Stored transposed (D, hidden).
    bound1 = 1.0 / np.sqrt(D)
    w1 = jax.random.uniform(k1, (D, hidden_dim), jnp.float32, -bound1, bound1)
    # BatchNorm1d(hidden_dim), eval mode.
    gamma = 1.0 + 0.1 * jax.random.normal(k2, (hidden_dim,), jnp.float32)
    beta = 0.1 * jax.random.normal(k3, (hidden_dim,), jnp.float32)
    running_mean = 0.1 * jax.random.normal(k4, (hidden_dim,), jnp.float32)
    running_var = jnp.abs(1.0 + 0.1 * jax.random.normal(k5, (hidden_dim,), jnp.float32))
    eps = 1e-5
    bn_scale = gamma / jnp.sqrt(running_var + eps)
    bn_shift = beta - running_mean * bn_scale
    # Linear2: weight (n_class, hidden), bias (n_class,). Stored transposed.
    bound2 = 1.0 / np.sqrt(hidden_dim)
    kw, kb = jax.random.split(k6)
    w2 = jax.random.uniform(kw, (hidden_dim, n_class), jnp.float32, -bound2, bound2)
    b2 = jax.random.uniform(kb, (1, n_class), jnp.float32, -bound2, bound2)
    return {
        "w1": w1,
        "bn_scale": bn_scale.reshape(1, hidden_dim),
        "bn_shift": bn_shift.reshape(1, hidden_dim),
        "w2": w2,
        "b2": b2,
    }


def prepare_params(params):
    """One-time fold / pad / cast of the weights into kernel-ready layout.
    The kernel is weights-stationary, so pay this HBM round-trip once."""
    w1_folded = params["w1"] * params["bn_scale"]        # fold BN scale in f32
    D, Hd = w1_folded.shape
    C = params["w2"].shape[1]
    D_pad = _round_up(D, 128)
    H_pad = _round_up(Hd, 128)
    C_pad = _round_up(C, 128)
    tk = _choose_tk(D_pad)

    w1_p = jnp.zeros((D_pad, H_pad), jnp.bfloat16).at[:D, :Hd].set(
        w1_folded.astype(jnp.bfloat16))
    shift_p = jnp.zeros((1, H_pad), jnp.float32).at[:, :Hd].set(params["bn_shift"])
    w2_p = jnp.zeros((H_pad, C_pad), jnp.bfloat16).at[:Hd, :C].set(
        params["w2"].astype(jnp.bfloat16))
    # Large negative bias in padded class lanes -> softmax there underflows to 0.
    b2_p = jnp.full((1, C_pad), -1e30, jnp.float32).at[:, :C].set(params["b2"])
    return {"w1": w1_p, "shift": shift_p, "w2": w2_p, "b2": b2_p,
            "D": D, "Hd": Hd, "C": C, "tk": tk}


# ----------------------------- forward ---------------------------------------


def single_hidden_forward(x_nchw, prep, *, tb_max=512):
    """x_nchw: (B, C, H, W) float32. prep: output of prepare_params()."""
    B = x_nchw.shape[0]
    x_flat = x_nchw.reshape(B, -1).astype(jnp.float32)   # nn.Flatten()
    D = prep["D"]
    assert x_flat.shape[1] == D

    D_pad, H_pad = prep["w1"].shape
    C_pad = prep["w2"].shape[1]
    tk = prep["tk"]

    if D != D_pad:
        # Only when the flatten dim is not lane-aligned (per-call copy).
        x_flat = jnp.zeros((B, D_pad), jnp.float32).at[:, :D].set(x_flat)

    TB = _choose_tb(B, tb_max)
    grid_b = -(-B // TB)
    grid_k = D_pad // tk

    cost = pl.CostEstimate(
        flops=int(2 * B * (D * prep["Hd"] + prep["Hd"] * prep["C"])),
        transcendentals=int(B * C_pad),
        bytes_accessed=int(B * D_pad * 4 + prep["w1"].size * 2 + prep["w2"].size * 2
                           + H_pad * 4 + C_pad * 4 + B * C_pad * 4),
    )

    out = pl.pallas_call(
        single_hidden_kernel,
        out_shape=jax.ShapeDtypeStruct((B, C_pad), jnp.float32),
        grid_spec=pltpu.PrefetchScalarGridSpec(
            num_scalar_prefetch=0,
            grid=(grid_b, grid_k),
            in_specs=[
                pl.BlockSpec((TB, tk), lambda b, k: (b, k)),       # x: streamed tile
                pl.BlockSpec((tk, H_pad), lambda b, k: (k, 0)),    # w1: K-streamed
                pl.BlockSpec((1, H_pad), lambda b, k: (0, 0)),     # bn shift (resident)
                pl.BlockSpec((H_pad, C_pad), lambda b, k: (0, 0)),  # w2 (resident)
                pl.BlockSpec((1, C_pad), lambda b, k: (0, 0)),     # b2 (resident)
            ],
            out_specs=pl.BlockSpec((TB, C_pad), lambda b, k: (b, 0)),
            scratch_shapes=[pltpu.VMEM((TB, H_pad), jnp.float32)],
        ),
        compiler_params=pltpu.CompilerParams(
            dimension_semantics=("parallel", "arbitrary"),
            vmem_limit_bytes=_vmem_limit_bytes(TB, tk, H_pad, C_pad),
        ),
        cost_estimate=cost,
    )(x_flat, prep["w1"], prep["shift"], prep["w2"], prep["b2"])
    return out[:, :prep["C"]]


# ----------------------------- reference & test -------------------------------


def reference_forward(x_nchw, params):
    """Pure-JAX f32 reference (PyTorch eval-mode semantics)."""
    B = x_nchw.shape[0]
    x = x_nchw.reshape(B, -1).astype(jnp.float32)
    h = x @ params["w1"]
    h = h * params["bn_scale"] + params["bn_shift"]
    h = jnp.maximum(h, 0.0)
    logits = h @ params["w2"] + params["b2"]
    return jax.nn.softmax(logits, axis=1)


if __name__ == "__main__":
    key = jax.random.PRNGKey(0)
    kx, kp = jax.random.split(key)

    # Small shapes consistent with the module: input (C,H,W)=(4,16,16), batch=2.
    B, C, H, W = 2, 4, 16, 16
    hidden_dim = 32
    n_class = 10

    x = jax.random.normal(kx, (B, C, H, W), jnp.float32)
    params = init_params((C, H, W), hidden_dim, n_class, kp)
    prep = prepare_params(params)          # one-time weight fold/pad/cast

    out = single_hidden_forward(x, prep)
    out = jax.block_until_ready(out)
    out_np = np.asarray(out)

    ref = np.asarray(reference_forward(x, params))
    # Tolerance loosened vs. pure f32 because both matmuls run in bf16
    # (with f32 accumulation).
    np.testing.assert_allclose(out_np, ref, rtol=1e-2, atol=1e-2)
    # Exact softmax normalization: rows sum to 1 within f32 rounding.
    np.testing.assert_allclose(out_np.sum(axis=1), np.ones(B), rtol=1e-3, atol=1e-3)

    print("KERNEL_OK")
</pallas_src>

<mosaic_0001>
module attributes {stable_mosaic.version = 11 : i64} {
  func.func @single_hidden_kernel(%arg0: i32, %arg1: i32, %arg2: memref<16x1024xf32, #tpu.memory_space<vmem>>, %arg3: memref<1024x128xbf16, #tpu.memory_space<vmem>>, %arg4: memref<1x128xf32, #tpu.memory_space<vmem>>, %arg5: memref<128x128xbf16, #tpu.memory_space<vmem>>, %arg6: memref<1x128xf32, #tpu.memory_space<vmem>>, %arg7: memref<16x128xf32, #tpu.memory_space<vmem>>, %arg8: memref<16x128xf32, #tpu.memory_space<vmem>>) attributes {dimension_semantics = [#tpu.dimension_semantics<parallel>, #tpu.dimension_semantics<arbitrary>], iteration_bounds = array<i64: 1, 1>, scalar_prefetch = 0 : i64, scratch_operands = 1 : i64, tpu.core_type = #tpu.core_type<tc>, window_params = [{transform_indices = @transform_0, window_bounds = array<i64: 16, 1024>}, {transform_indices = @transform_1, window_bounds = array<i64: 1024, 128>}, {pipeline_mode = #tpu.pipeline_mode<synchronous>, transform_indices = @transform_2, window_bounds = array<i64: 1, 128>}, {pipeline_mode = #tpu.pipeline_mode<synchronous>, transform_indices = @transform_3, window_bounds = array<i64: 128, 128>}, {pipeline_mode = #tpu.pipeline_mode<synchronous>, transform_indices = @transform_4, window_bounds = array<i64: 1, 128>}, {transform_indices = @transform_5, window_bounds = array<i64: 16, 128>}]} {
    %c0_i32 = arith.constant 0 : i32
    %0 = arith.cmpi eq, %arg1, %c0_i32 : i32
    %1 = arith.extui %0 : i1 to i32
    %c0_i32_0 = arith.constant 0 : i32
    %2 = arith.cmpi ne, %1, %c0_i32_0 : i32
    scf.if %2 {
      %cst_10 = arith.constant 0.000000e+00 : f32
      %13 = vector.broadcast %cst_10 : f32 to vector<16x128xf32>
      %c0_11 = arith.constant 0 : index
      %c0_12 = arith.constant 0 : index
      %14 = vector.load %arg8[%c0_11, %c0_12] : memref<16x128xf32, #tpu.memory_space<vmem>>, vector<16x128xf32>
      tpu.vector_store %arg8[%c0_11, %c0_12], %13 {strides = array<i32>} : memref<16x128xf32, #tpu.memory_space<vmem>>, vector<16x128xf32>,
    } else {
    }
    %c0 = arith.constant 0 : index
    %c0_1 = arith.constant 0 : index
    %3 = vector.load %arg8[%c0, %c0_1] : memref<16x128xf32, #tpu.memory_space<vmem>>, vector<16x128xf32>
    %c0_2 = arith.constant 0 : index
    %c0_3 = arith.constant 0 : index
    %4 = vector.load %arg2[%c0_2, %c0_3] : memref<16x1024xf32, #tpu.memory_space<vmem>>, vector<16x1024xf32>
    %5 = arith.truncf %4 : vector<16x1024xf32> to vector<16x1024xbf16>
    %c0_4 = arith.constant 0 : index
    %c0_5 = arith.constant 0 : index
    %6 = vector.load %arg3[%c0_4, %c0_5] : memref<1024x128xbf16, #tpu.memory_space<vmem>>, vector<1024x128xbf16>
    %cst = arith.constant dense<0.000000e+00> : vector<16x128xf32>
    %7 = tpu.matmul %5, %6, %cst {dimension_numbers = #tpu.dot_dimension_numbers<[1], [0], [0], [1], [0, 0, 1, 1], [], []>} : vector<16x1024xbf16>, vector<1024x128xbf16>, vector<16x128xf32> -> vector<16x128xf32>
    %8 = arith.addf %3, %7 : vector<16x128xf32>
    %c0_6 = arith.constant 0 : index
    %c0_7 = arith.constant 0 : index
    %9 = vector.load %arg8[%c0_6, %c0_7] : memref<16x128xf32, #tpu.memory_space<vmem>>, vector<16x128xf32>
    tpu.vector_store %arg8[%c0_6, %c0_7], %8 {strides = array<i32>} : memref<16x128xf32, #tpu.memory_space<vmem>>, vector<16x128xf32>,
    %c0_i32_8 = arith.constant 0 : i32
    %10 = arith.cmpi eq, %arg1, %c0_i32_8 : i32
    %11 = arith.extui %10 : i1 to i32
    %c0_i32_9 = arith.constant 0 : i32
    %12 = arith.cmpi ne, %11, %c0_i32_9 : i32
    scf.if %12 {
      %c0_10 = arith.constant 0 : index
      %c0_11 = arith.constant 0 : index
      %13 = vector.load %arg8[%c0_10, %c0_11] : memref<16x128xf32, #tpu.memory_space<vmem>>, vector<16x128xf32>
      %c0_12 = arith.constant 0 : index
      %c0_13 = arith.constant 0 : index
      %14 = vector.load %arg4[%c0_12, %c0_13] : memref<1x128xf32, #tpu.memory_space<vmem>>, vector<1x128xf32>
      %15 = vector.broadcast %14 : vector<1x128xf32> to vector<16x128xf32>
      %16 = arith.addf %13, %15 : vector<16x128xf32>
      %cst_14 = arith.constant 0.000000e+00 : f32
      %17 = vector.broadcast %cst_14 : f32 to vector<16x128xf32>
      %18 = arith.maximumf %16, %17 : vector<16x128xf32>
      %19 = arith.truncf %18 : vector<16x128xf32> to vector<16x128xbf16>
      %c0_15 = arith.constant 0 : index
      %c0_16 = arith.constant 0 : index
      %20 = vector.load %arg5[%c0_15, %c0_16] : memref<128x128xbf16, #tpu.memory_space<vmem>>, vector<128x128xbf16>
      %cst_17 = arith.constant dense<0.000000e+00> : vector<16x128xf32>
      %21 = tpu.matmul %19, %20, %cst_17 {dimension_numbers = #tpu.dot_dimension_numbers<[1], [0], [0], [1], [0, 0, 1, 1], [], []>} : vector<16x128xbf16>, vector<128x128xbf16>, vector<16x128xf32> -> vector<16x128xf32>
      %c0_18 = arith.constant 0 : index
      %c0_19 = arith.constant 0 : index
      %22 = vector.load %arg6[%c0_18, %c0_19] : memref<1x128xf32, #tpu.memory_space<vmem>>, vector<1x128xf32>
      %23 = vector.broadcast %22 : vector<1x128xf32> to vector<16x128xf32>
      %24 = arith.addf %21, %23 : vector<16x128xf32>
      %cst_20 = arith.constant dense<0xFF800000> : vector<16xf32>
      %25 = vector.multi_reduction <maximumf>, %24, %cst_20 [1] : vector<16x128xf32> to vector<16xf32>
      %26 = vector.shape_cast %25 : vector<16xf32> to vector<16x1xf32>
      %27 = vector.broadcast %26 : vector<16x1xf32> to vector<16x128xf32>
      %28 = arith.subf %24, %27 : vector<16x128xf32>
      %29 = math.exp %28 : vector<16x128xf32>
      %cst_21 = arith.constant dense<0.000000e+00> : vector<16xf32>
      %30 = vector.multi_reduction <add>, %29, %cst_21 [1] : vector<16x128xf32> to vector<16xf32>
      %31 = vector.shape_cast %30 : vector<16xf32> to vector<16x1xf32>
      %32 = vector.broadcast %31 : vector<16x1xf32> to vector<16x128xf32>
      %33 = arith.divf %29, %32 : vector<16x128xf32>
      %c0_22 = arith.constant 0 : index
      %c0_23 = arith.constant 0 : index
      %34 = vector.load %arg7[%c0_22, %c0_23] : memref<16x128xf32, #tpu.memory_space<vmem>>, vector<16x128xf32>
      tpu.vector_store %arg7[%c0_22, %c0_23], %33 {strides = array<i32>} : memref<16x128xf32, #tpu.memory_space<vmem>>, vector<16x128xf32>,
    } else {
    }
    return
  }
  func.func @transform_0(%arg0: i32, %arg1: i32) -> (i32, i32) {
    %c0_i32 = arith.constant 0 : i32
    return %arg0, %arg1 : i32, i32
  }
  func.func @transform_1(%arg0: i32, %arg1: i32) -> (i32, i32) {
    %c0_i32 = arith.constant 0 : i32
    %c0_i32_0 = arith.constant 0 : i32
    return %arg1, %c0_i32 : i32, i32
  }
  func.func @transform_2(%arg0: i32, %arg1: i32) -> (i32, i32) {
    %c0_i32 = arith.constant 0 : i32
    %c0_i32_0 = arith.constant 0 : i32
    %c0_i32_1 = arith.constant 0 : i32
    return %c0_i32, %c0_i32_0 : i32, i32
  }
  func.func @transform_3(%arg0: i32, %arg1: i32) -> (i32, i32) {
    %c0_i32 = arith.constant 0 : i32
    %c0_i32_0 = arith.constant 0 : i32
    %c0_i32_1 = arith.constant 0 : i32
    return %c0_i32, %c0_i32_0 : i32, i32
  }
  func.func @transform_4(%arg0: i32, %arg1: i32) -> (i32, i32) {
    %c0_i32 = arith.constant 0 : i32
    %c0_i32_0 = arith.constant 0 : i32
    %c0_i32_1 = arith.constant 0 : i32
    return %c0_i32, %c0_i32_0 : i32, i32
  }
  func.func @transform_5(%arg0: i32, %arg1: i32) -> (i32, i32) {
    %c0_i32 = arith.constant 0 : i32
    %c0_i32_0 = arith.constant 0 : i32
    return %arg0, %c0_i32 : i32, i32
  }
}

</mosaic_0001>

<llo_original>
// kernel: tpu_custom_call.1
$region0: #{tpu_custom_call.1}
  #allocation0 [shape = 'u32[]', space=smem, size = 0x4, offset = 0x4, fixed_abs, tag = 'smem constant byte address 0x4 - core index']
  #allocation1 [shape = 'u32[144,128]{1,0:T(1,128)}', space=vmem, size = 0x12000, scoped, tag = 'internal scratch']
  #allocation2 [shape = 'f32[16,128]{1,0:T(8,128)}', space=vmem, size = 0x2000, scoped, tag = 'scratch operand']
  %s0 = inlined_call_operand.hbm [shape: f32[2,1024], index: 0, kind: input, shape index: {}]
  %s1 = inlined_call_operand.hbm [shape: bf16[1024,128], index: 1, kind: input, shape index: {}]
  %s2 = inlined_call_operand.vmem [shape: f32[1,128], index: 2, kind: input, shape index: {}]
  %s3 = inlined_call_operand.hbm [shape: bf16[128,128], index: 3, kind: input, shape index: {}]
  %s4 = inlined_call_operand.vmem [shape: f32[1,128], index: 4, kind: input, shape index: {}]
  %s5 = inlined_call_operand.hbm [shape: f32[2,128], index: 5, kind: output, shape index: {}]
  %s6 = sld [smem:[#allocation0]]
  $region50: #{tpu_custom_call.1} parent=0
    _
  %s8 = ssub.s32 1, %s6
  %s9 = scalar_select 0, %s8, %s6
  $region1: #{tpu_custom_call.1} parent=0
    #allocation3 [shape = 'u8[65536]{0}', space=vmem, size = 0x10000, scoped, tag = 'input window, operand 0, single buffered']
    #allocation4 [shape = 's32[1]{0}', space=sflag, size = 0x4, scoped, tag = 'scoped memory for tpu_custom_call.1']
    #allocation5 [shape = 's32[1]{0}', space=sflag, size = 0x4, scoped, tag = 'scoped memory for tpu_custom_call.1']
    #allocation6 [shape = 'u8[262144]{0}', space=vmem, size = 0x40000, scoped, tag = 'input window, operand 1, single buffered']
    #allocation7 [shape = 's32[1]{0}', space=sflag, size = 0x4, scoped, tag = 'scoped memory for tpu_custom_call.1']
    #allocation8 [shape = 'u8[32768]{0}', space=vmem, size = 0x8000, scoped, tag = 'input window, operand 3, single buffered']
    #allocation9 [shape = 'u8[8192]{0}', space=vmem, size = 0x2000, scoped, tag = 'output window, operand 0, single buffered']
    %10 = vsyncpa [#allocation4], 0
    %11 = vsyncpa [#allocation7], 0
    %12 = vsyncpa [#allocation5], 0
    // Predicated region
    $region2: #{tpu_custom_call.1} parent=1 // pred_check
      _
    $region3: #{tpu_custom_call.1} parent=1 // pred_check_branch
      %14 = sbr.rel (0) target = $region5
    $region4: #{tpu_custom_call.1} parent=1 // pred_region
      %s16 = ssub.s32 2048, 256
      %17 = vsyncadd [#allocation4], %s16
      %s18 = sshll.u32 [#allocation3], 4
      %s19 = int_to_ptr.vmem [resolvable:$true] %s18
      %24 = dma.hbm_to_vmem [thread:$0]  %s0, 256, %s19, [#allocation4], 256, 256, 16
    $region5: #{tpu_custom_call.1} parent=1 // pred_fallthru
      _
    // Predicated region
    $region6: #{tpu_custom_call.1} parent=1 // pred_check
      _
    $region7: #{tpu_custom_call.1} parent=1 // pred_check_branch
      %26 = sbr.rel (0) target = $region9
    $region8: #{tpu_custom_call.1} parent=1 // pred_region
      %s28 = ssub.s32 8192, 8192
      %29 = vsyncadd [#allocation7], %s28
      %s30 = sshll.u32 [#allocation6], 4
      %s31 = int_to_ptr.vmem [resolvable:$true] %s30
      %36 = dma.hbm_to_vmem [thread:$0]  %s1, 8192, %s31, [#allocation7], 64, 64, 4
    $region9: #{tpu_custom_call.1} parent=1 // pred_fallthru
      _
    // Predicated region
    $region10: #{tpu_custom_call.1} parent=1 // pred_check
      _
    $region11: #{tpu_custom_call.1} parent=1 // pred_check_branch
      %38 = sbr.rel (0) target = $region13
    $region12: #{tpu_custom_call.1} parent=1 // pred_region
      _
    $region13: #{tpu_custom_call.1} parent=1 // pred_fallthru
      _
    // Predicated region
    $region14: #{tpu_custom_call.1} parent=1 // pred_check
      _
    $region15: #{tpu_custom_call.1} parent=1 // pred_check_branch
      %40 = sbr.rel (0) target = $region17
    $region16: #{tpu_custom_call.1} parent=1 // pred_region
      %s42 = ssub.s32 1024, 1024
      %43 = vsyncadd [#allocation7], %s42
      %s44 = sshll.u32 [#allocation8], 4
      %s45 = int_to_ptr.vmem [resolvable:$true] %s44
      %50 = dma.hbm_to_vmem [thread:$0]  %s3, 1024, %s45, [#allocation7], 64, 64, 4
    $region17: #{tpu_custom_call.1} parent=1 // pred_fallthru
      _
    // Predicated region
    $region18: #{tpu_custom_call.1} parent=1 // pred_check
      _
    $region19: #{tpu_custom_call.1} parent=1 // pred_check_branch
      %52 = sbr.rel (0) target = $region21
    $region20: #{tpu_custom_call.1} parent=1 // pred_region
      _
    $region21: #{tpu_custom_call.1} parent=1 // pred_fallthru
      _
    // Predicated region
    $region22: #{tpu_custom_call.1} parent=1 // pred_check
      _
    $region23: #{tpu_custom_call.1} parent=1 // pred_check_branch
      %54 = sbr.rel (0) target = $region25
    $region24: #{tpu_custom_call.1} parent=1 // pred_region
      %55 = dma.done [#allocation4], 2048
    $region25: #{tpu_custom_call.1} parent=1 // pred_fallthru
      _
    // Predicated region
    $region26: #{tpu_custom_call.1} parent=1 // pred_check
      _
    $region27: #{tpu_custom_call.1} parent=1 // pred_check_branch
      %57 = sbr.rel (0) target = $region29
    $region28: #{tpu_custom_call.1} parent=1 // pred_region
      %58 = dma.done [#allocation7], 8192
    $region29: #{tpu_custom_call.1} parent=1 // pred_fallthru
      _
    // Predicated region
    $region30: #{tpu_custom_call.1} parent=1 // pred_check
      _
    $region31: #{tpu_custom_call.1} parent=1 // pred_check_branch
      %60 = sbr.rel (0) target = $region33
    $region32: #{tpu_custom_call.1} parent=1 // pred_region
      %61 = dma.done [#allocation7], 1024
    $region33: #{tpu_custom_call.1} parent=1 // pred_fallthru
      _
    %p63 = scmp.eq.s32.totalorder 0, 0
    // Predicated region
    $region34: #{tpu_custom_call.1} parent=1 // pred_check
      %p64 = pneg %p63
    $region35: #{tpu_custom_call.1} parent=1 // pred_check_branch
      %66 = sbr.rel (%p64) target = $region37
    $region36: #{tpu_custom_call.1} parent=1 // pred_region
      %67 = vst [vmem:[#allocation2] sm:$0xff] 0.0
      %68 = vst [vmem:[#allocation2 + $0x8] sm:$0xff] 0.0
    $region37: #{tpu_custom_call.1} parent=1 // pred_fallthru
      _
    %v69 = vld [vmem:[#allocation2] sm:$0xff]
    %v70 = vld [vmem:[#allocation2 + $0x8] sm:$0xff]
    %v71 = vld [vmem:[#allocation3] sm:$0xff]
    %v72 = vld [vmem:[#allocation3 + $0x8] sm:$0xff]
    %v73 = vld [vmem:[#allocation3 + $0x10] sm:$0xff]
    %v74 = vld [vmem:[#allocation3 + $0x18] sm:$0xff]
    %v75 = vld [vmem:[#allocation3 + $0x20] sm:$0xff]
    %v76 = vld [vmem:[#allocation3 + $0x28] sm:$0xff]
    %v77 = vld [vmem:[#allocation3 + $0x30] sm:$0xff]
    %v78 = vld [vmem:[#allocation3 + $0x38] sm:$0xff]
    %v79 = vld [vmem:[#allocation3 + $0x40] sm:$0xff]
    %v80 = vld [vmem:[#allocation3 + $0x48] sm:$0xff]
    %v81 = vld [vmem:[#allocation3 + $0x50] sm:$0xff]
    %v82 = vld [vmem:[#allocation3 + $0x58] sm:$0xff]
    %v83 = vld [vmem:[#allocation3 + $0x60] sm:$0xff]
    %v84 = vld [vmem:[#allocation3 + $0x68] sm:$0xff]
    %v85 = vld [vmem:[#allocation3 + $0x70] sm:$0xff]
    %v86 = vld [vmem:[#allocation3 + $0x78] sm:$0xff]
    %v103 = vcombine.low %v71, %v73
    %v104 = vcombine.high %v71, %v73
    %v105 = vcombine.low %v75, %v77
    %v106 = vcombine.high %v75, %v77
    %v108 = vunpack.c.l.s4 1983009808
    %v109 = vunpack.c.0.s8 %v108
    %v110 = vlaneseq
    %v111 = vshrl.u32 %v110, 7
    %v112 = vsub.s32 %v109, %v111
    %v113 = vrot.slane %v103, %v112
    %v115 = vunpack.c.l.s4 1983009808
    %v116 = vunpack.c.0.s8 %v115
    %v117 = vlaneseq
    %v118 = vshrl.u32 %v117, 7
    %v119 = vsub.s32 %v116, %v118
    %v120 = vrot.slane %v104, %v119
    %v122 = vunpack.c.l.s4 1983009808
    %v123 = vunpack.c.0.s8 %v122
    %v124 = vlaneseq
    %v125 = vshrl.u32 %v124, 7
    %v126 = vsub.s32 %v123, %v125
    %v127 = vrot.slane %v105, %v126
    %v129 = vunpack.c.l.s4 1983009808
    %v130 = vunpack.c.0.s8 %v129
    %v131 = vlaneseq
    %v132 = vshrl.u32 %v131, 7
    %v133 = vsub.s32 %v130, %v132
    %v134 = vrot.slane %v106, %v133
    %v135 = vcombine.low %v113, %v127
    %v136 = vcombine.high %v113, %v127
    %v137 = vcombine.low %v120, %v134
    %v138 = vcombine.high %v120, %v134
    %v139 = vcombine.low %v72, %v74
    %v140 = vcombine.high %v72, %v74
    %v141 = vcombine.low %v76, %v78
    %v142 = vcombine.high %v76, %v78
    %v144 = vunpack.c.l.s4 1983009808
    %v145 = vunpack.c.0.s8 %v144
    %v146 = vlaneseq
    %v147 = vshrl.u32 %v146, 7
    %v148 = vsub.s32 %v145, %v147
    %v149 = vrot.slane %v139, %v148
    %v151 = vunpack.c.l.s4 1983009808
    %v152 = vunpack.c.0.s8 %v151
    %v153 = vlaneseq
    %v154 = vshrl.u32 %v153, 7
    %v155 = vsub.s32 %v152, %v154
    %v156 = vrot.slane %v140, %v155
    %v158 = vunpack.c.l.s4 1983009808
    %v159 = vunpack.c.0.s8 %v158
    %v160 = vlaneseq
    %v161 = vshrl.u32 %v160, 7
    %v162 = vsub.s32 %v159, %v161
    %v163 = vrot.slane %v141, %v162
    %v165 = vunpack.c.l.s4 1983009808
    %v166 = vunpack.c.0.s8 %v165
    %v167 = vlaneseq
    %v168 = vshrl.u32 %v167, 7
    %v169 = vsub.s32 %v166, %v168
    %v170 = vrot.slane %v142, %v169
    %v171 = vcombine.low %v149, %v163
    %v172 = vcombine.high %v149, %v163
    %v173 = vcombine.low %v156, %v170
    %v174 = vcombine.high %v156, %v170
    %v175 = vcombine.low %v79, %v81
    %v176 = vcombine.high %v79, %v81
    %v177 = vcombine.low %v83, %v85
    %v178 = vcombine.high %v83, %v85
    %v180 = vunpack.c.l.s4 1983009808
    %v181 = vunpack.c.0.s8 %v180
    %v182 = vlaneseq
    %v183 = vshrl.u32 %v182, 7
    %v184 = vsub.s32 %v181, %v183
    %v185 = vrot.slane %v175, %v184
    %v187 = vunpack.c.l.s4 1983009808
    %v188 = vunpack.c.0.s8 %v187
    %v189 = vlaneseq
    %v190 = vshrl.u32 %v189, 7
    %v191 = vsub.s32 %v188, %v190
    %v192 = vrot.slane %v176, %v191
    %v194 = vunpack.c.l.s4 1983009808
    %v195 = vunpack.c.0.s8 %v194
    %v196 = vlaneseq
    %v197 = vshrl.u32 %v196, 7
    %v198 = vsub.s32 %v195, %v197
    %v199 = vrot.slane %v177, %v198
    %v201 = vunpack.c.l.s4 1983009808
    %v202 = vunpack.c.0.s8 %v201
    %v203 = vlaneseq
    %v204 = vshrl.u32 %v203, 7
    %v205 = vsub.s32 %v202, %v204
    %v206 = vrot.slane %v178, %v205
    %v207 = vcombine.low %v185, %v199
    %v208 = vcombine.high %v185, %v199
    %v209 = vcombine.low %v192, %v206
    %v210 = vcombine.high %v192, %v206
    %v211 = vcombine.low %v80, %v82
    %v212 = vcombine.high %v80, %v82
    %v213 = vcombine.low %v84, %v86
    %v214 = vcombine.high %v84, %v86
    %v216 = vunpack.c.l.s4 1983009808
    %v217 = vunpack.c.0.s8 %v216
    %v218 = vlaneseq
    %v219 = vshrl.u32 %v218, 7
    %v220 = vsub.s32 %v217, %v219
    %v221 = vrot.slane %v211, %v220
    %v223 = vunpack.c.l.s4 1983009808
    %v224 = vunpack.c.0.s8 %v223
    %v225 = vlaneseq
    %v226 = vshrl.u32 %v225, 7
    %v227 = vsub.s32 %v224, %v226
    %v228 = vrot.slane %v212, %v227
    %v230 = vunpack.c.l.s4 1983009808
    %v231 = vunpack.c.0.s8 %v230
    %v232 = vlaneseq
    %v233 = vshrl.u32 %v232, 7
    %v234 = vsub.s32 %v231, %v233
    %v235 = vrot.slane %v213, %v234
    %v237 = vunpack.c.l.s4 1983009808
    %v238 = vunpack.c.0.s8 %v237
    %v239 = vlaneseq
    %v240 = vshrl.u32 %v239, 7
    %v241 = vsub.s32 %v238, %v240
    %v242 = vrot.slane %v214, %v241
    %v243 = vcombine.low %v221, %v235
    %v244 = vcombine.high %v221, %v235
    %v245 = vcombine.low %v228, %v242
    %v246 = vcombine.high %v228, %v242
    %v263 = vpack.c.bf16 %v207, %v135
    %v264 = vpack.c.bf16 %v208, %v136
    %v265 = vpack.c.bf16 %v209, %v137
    %v266 = vpack.c.bf16 %v210, %v138
    %v267 = vpack.c.bf16 %v243, %v171
    %v268 = vpack.c.bf16 %v244, %v172
    %v269 = vpack.c.bf16 %v245, %v173
    %v270 = vpack.c.bf16 %v246, %v174
    %v271 = vld [vmem:[#allocation6] sm:$0xf]
    %v272 = vld [vmem:[#allocation6 + $0x4] sm:$0xf]
    %v273 = vld [vmem:[#allocation6 + $0x8] sm:$0xf]
    %v274 = vld [vmem:[#allocation6 + $0xc] sm:$0xf]
    %v275 = vld [vmem:[#allocation6 + $0x10] sm:$0xf]
    %v276 = vld [vmem:[#allocation6 + $0x14] sm:$0xf]
    %v277 = vld [vmem:[#allocation6 + $0x18] sm:$0xf]
    %v278 = vld [vmem:[#allocation6 + $0x1c] sm:$0xf]
    %v279 = vld [vmem:[#allocation6 + $0x20] sm:$0xf]
    %v280 = vld [vmem:[#allocation6 + $0x24] sm:$0xf]
    %v281 = vld [vmem:[#allocation6 + $0x28] sm:$0xf]
    %v282 = vld [vmem:[#allocation6 + $0x2c] sm:$0xf]
    %v283 = vld [vmem:[#allocation6 + $0x30] sm:$0xf]
    %v284 = vld [vmem:[#allocation6 + $0x34] sm:$0xf]
    %v285 = vld [vmem:[#allocation6 + $0x38] sm:$0xf]
    %v286 = vld [vmem:[#allocation6 + $0x3c] sm:$0xf]
    %v287 = vld [vmem:[#allocation6 + $0x40] sm:$0xf]
    %v288 = vld [vmem:[#allocation6 + $0x44] sm:$0xf]
    %v289 = vld [vmem:[#allocation6 + $0x48] sm:$0xf]
    %v290 = vld [vmem:[#allocation6 + $0x4c] sm:$0xf]
    %v291 = vld [vmem:[#allocation6 + $0x50] sm:$0xf]
    %v292 = vld [vmem:[#allocation6 + $0x54] sm:$0xf]
    %v293 = vld [vmem:[#allocation6 + $0x58] sm:$0xf]
    %v294 = vld [vmem:[#allocation6 + $0x5c] sm:$0xf]
    %v295 = vld [vmem:[#allocation6 + $0x60] sm:$0xf]
    %v296 = vld [vmem:[#allocation6 + $0x64] sm:$0xf]
    %v297 = vld [vmem:[#allocation6 + $0x68] sm:$0xf]
    %v298 = vld [vmem:[#allocation6 + $0x6c] sm:$0xf]
    %v299 = vld [vmem:[#allocation6 + $0x70] sm:$0xf]
    %v300 = vld [vmem:[#allocation6 + $0x74] sm:$0xf]
    %v301 = vld [vmem:[#allocation6 + $0x78] sm:$0xf]
    %v302 = vld [vmem:[#allocation6 + $0x7c] sm:$0xf]
    %v303 = vld [vmem:[#allocation6 + $0x80] sm:$0xf]
    %v304 = vld [vmem:[#allocation6 + $0x84] sm:$0xf]
    %v305 = vld [vmem:[#allocation6 + $0x88] sm:$0xf]
    %v306 = vld [vmem:[#allocation6 + $0x8c] sm:$0xf]
    %v307 = vld [vmem:[#allocation6 + $0x90] sm:$0xf]
    %v308 = vld [vmem:[#allocation6 + $0x94] sm:$0xf]
    %v309 = vld [vmem:[#allocation6 + $0x98] sm:$0xf]
    %v310 = vld [vmem:[#allocation6 + $0x9c] sm:$0xf]
    %v311 = vld [vmem:[#allocation6 + $0xa0] sm:$0xf]
    %v312 = vld [vmem:[#allocation6 + $0xa4] sm:$0xf]
    %v313 = vld [vmem:[#allocation6 + $0xa8] sm:$0xf]
    %v314 = vld [vmem:[#allocation6 + $0xac] sm:$0xf]
    %v315 = vld [vmem:[#allocation6 + $0xb0] sm:$0xf]
    %v316 = vld [vmem:[#allocation6 + $0xb4] sm:$0xf]
    %v317 = vld [vmem:[#allocation6 + $0xb8] sm:$0xf]
    %v318 = vld [vmem:[#allocation6 + $0xbc] sm:$0xf]
    %v319 = vld [vmem:[#allocation6 + $0xc0] sm:$0xf]
    %v320 = vld [vmem:[#allocation6 + $0xc4] sm:$0xf]
    %v321 = vld [vmem:[#allocation6 + $0xc8] sm:$0xf]
    %v322 = vld [vmem:[#allocation6 + $0xcc] sm:$0xf]
    %v323 = vld [vmem:[#allocation6 + $0xd0] sm:$0xf]
    %v324 = vld [vmem:[#allocation6 + $0xd4] sm:$0xf]
    %v325 = vld [vmem:[#allocation6 + $0xd8] sm:$0xf]
    %v326 = vld [vmem:[#allocation6 + $0xdc] sm:$0xf]
    %v327 = vld [vmem:[#allocation6 + $0xe0] sm:$0xf]
    %v328 = vld [vmem:[#allocation6 + $0xe4] sm:$0xf]
    %v329 = vld [vmem:[#allocation6 + $0xe8] sm:$0xf]
    %v330 = vld [vmem:[#allocation6 + $0xec] sm:$0xf]
    %v331 = vld [vmem:[#allocation6 + $0xf0] sm:$0xf]
    %v332 = vld [vmem:[#allocation6 + $0xf4] sm:$0xf]
    %v333 = vld [vmem:[#allocation6 + $0xf8] sm:$0xf]
    %v334 = vld [vmem:[#allocation6 + $0xfc] sm:$0xf]
    %v335 = vld [vmem:[#allocation6 + $0x100] sm:$0xf]
    %v336 = vld [vmem:[#allocation6 + $0x104] sm:$0xf]
    %v337 = vld [vmem:[#allocation6 + $0x108] sm:$0xf]
    %v338 = vld [vmem:[#allocation6 + $0x10c] sm:$0xf]
    %v339 = vld [vmem:[#allocation6 + $0x110] sm:$0xf]
    %v340 = vld [vmem:[#allocation6 + $0x114] sm:$0xf]
    %v341 = vld [vmem:[#allocation6 + $0x118] sm:$0xf]
    %v342 = vld [vmem:[#allocation6 + $0x11c] sm:$0xf]
    %v343 = vld [vmem:[#allocation6 + $0x120] sm:$0xf]
    %v344 = vld [vmem:[#allocation6 + $0x124] sm:$0xf]
    %v345 = vld [vmem:[#allocation6 + $0x128] sm:$0xf]
    %v346 = vld [vmem:[#allocation6 + $0x12c] sm:$0xf]
    %v347 = vld [vmem:[#allocation6 + $0x130] sm:$0xf]
    %v348 = vld [vmem:[#allocation6 + $0x134] sm:$0xf]
    %v349 = vld [vmem:[#allocation6 + $0x138] sm:$0xf]
    %v350 = vld [vmem:[#allocation6 + $0x13c] sm:$0xf]
    %v351 = vld [vmem:[#allocation6 + $0x140] sm:$0xf]
    %v352 = vld [vmem:[#allocation6 + $0x144] sm:$0xf]
    %v353 = vld [vmem:[#allocation6 + $0x148] sm:$0xf]
    %v354 = vld [vmem:[#allocation6 + $0x14c] sm:$0xf]
    %v355 = vld [vmem:[#allocation6 + $0x150] sm:$0xf]
    %v356 = vld [vmem:[#allocation6 + $0x154] sm:$0xf]
    %v357 = vld [vmem:[#allocation6 + $0x158] sm:$0xf]
    %v358 = vld [vmem:[#allocation6 + $0x15c] sm:$0xf]
    %v359 = vld [vmem:[#allocation6 + $0x160] sm:$0xf]
    %v360 = vld [vmem:[#allocation6 + $0x164] sm:$0xf]
    %v361 = vld [vmem:[#allocation6 + $0x168] sm:$0xf]
    %v362 = vld [vmem:[#allocation6 + $0x16c] sm:$0xf]
    %v363 = vld [vmem:[#allocation6 + $0x170] sm:$0xf]
    %v364 = vld [vmem:[#allocation6 + $0x174] sm:$0xf]
    %v365 = vld [vmem:[#allocation6 + $0x178] sm:$0xf]
    %v366 = vld [vmem:[#allocation6 + $0x17c] sm:$0xf]
    %v367 = vld [vmem:[#allocation6 + $0x180] sm:$0xf]
    %v368 = vld [vmem:[#allocation6 + $0x184] sm:$0xf]
    %v369 = vld [vmem:[#allocation6 + $0x188] sm:$0xf]
    %v370 = vld [vmem:[#allocation6 + $0x18c] sm:$0xf]
    %v371 = vld [vmem:[#allocation6 + $0x190] sm:$0xf]
    %v372 = vld [vmem:[#allocation6 + $0x194] sm:$0xf]
    %v373 = vld [vmem:[#allocation6 + $0x198] sm:$0xf]
    %v374 = vld [vmem:[#allocation6 + $0x19c] sm:$0xf]
    %v375 = vld [vmem:[#allocation6 + $0x1a0] sm:$0xf]
    %v376 = vld [vmem:[#allocation6 + $0x1a4] sm:$0xf]
    %v377 = vld [vmem:[#allocation6 + $0x1a8] sm:$0xf]
    %v378 = vld [vmem:[#allocation6 + $0x1ac] sm:$0xf]
    %v379 = vld [vmem:[#allocation6 + $0x1b0] sm:$0xf]
    %v380 = vld [vmem:[#allocation6 + $0x1b4] sm:$0xf]
    %v381 = vld [vmem:[#allocation6 + $0x1b8] sm:$0xf]
    %v382 = vld [vmem:[#allocation6 + $0x1bc] sm:$0xf]
    %v383 = vld [vmem:[#allocation6 + $0x1c0] sm:$0xf]
    %v384 = vld [vmem:[#allocation6 + $0x1c4] sm:$0xf]
    %v385 = vld [vmem:[#allocation6 + $0x1c8] sm:$0xf]
    %v386 = vld [vmem:[#allocation6 + $0x1cc] sm:$0xf]
    %v387 = vld [vmem:[#allocation6 + $0x1d0] sm:$0xf]
    %v388 = vld [vmem:[#allocation6 + $0x1d4] sm:$0xf]
    %v389 = vld [vmem:[#allocation6 + $0x1d8] sm:$0xf]
    %v390 = vld [vmem:[#allocation6 + $0x1dc] sm:$0xf]
    %v391 = vld [vmem:[#allocation6 + $0x1e0] sm:$0xf]
    %v392 = vld [vmem:[#allocation6 + $0x1e4] sm:$0xf]
    %v393 = vld [vmem:[#allocation6 + $0x1e8] sm:$0xf]
    %v394 = vld [vmem:[#allocation6 + $0x1ec] sm:$0xf]
    %v395 = vld [vmem:[#allocation6 + $0x1f0] sm:$0xf]
    %v396 = vld [vmem:[#allocation6 + $0x1f4] sm:$0xf]
    %v397 = vld [vmem:[#allocation6 + $0x1f8] sm:$0xf]
    %v398 = vld [vmem:[#allocation6 + $0x1fc] sm:$0xf]
    %v527 = vunpack.c.l.b16 %v271
    %v528 = vunpack.c.l.b16 %v272
    %v529 = vunpack.c.l.b16 %v273
    %v530 = vunpack.c.l.b16 %v274
    %v531 = vunpack.c.l.b16 %v275
    %v532 = vunpack.c.l.b16 %v276
    %v533 = vunpack.c.l.b16 %v277
    %v534 = vunpack.c.l.b16 %v278
    %v535 = vunpack.c.l.b16 %v279
    %v536 = vunpack.c.l.b16 %v280
    %v537 = vunpack.c.l.b16 %v281
    %v538 = vunpack.c.l.b16 %v282
    %v539 = vunpack.c.l.b16 %v283
    %v540 = vunpack.c.l.b16 %v284
    %v541 = vunpack.c.l.b16 %v285
    %v542 = vunpack.c.l.b16 %v286
    %v543 = vunpack.c.l.b16 %v287
    %v544 = vunpack.c.l.b16 %v288
    %v545 = vunpack.c.l.b16 %v289
    %v546 = vunpack.c.l.b16 %v290
    %v547 = vunpack.c.l.b16 %v291
    %v548 = vunpack.c.l.b16 %v292
    %v549 = vunpack.c.l.b16 %v293
    %v550 = vunpack.c.l.b16 %v294
    %v551 = vunpack.c.l.b16 %v295
    %v552 = vunpack.c.l.b16 %v296
    %v553 = vunpack.c.l.b16 %v297
    %v554 = vunpack.c.l.b16 %v298
    %v555 = vunpack.c.l.b16 %v299
    %v556 = vunpack.c.l.b16 %v300
    %v557 = vunpack.c.l.b16 %v301
    %v558 = vunpack.c.l.b16 %v302
    %v559 = vunpack.c.l.b16 %v303
    %v560 = vunpack.c.l.b16 %v304
    %v561 = vunpack.c.l.b16 %v305
    %v562 = vunpack.c.l.b16 %v306
    %v563 = vunpack.c.l.b16 %v307
    %v564 = vunpack.c.l.b16 %v308
    %v565 = vunpack.c.l.b16 %v309
    %v566 = vunpack.c.l.b16 %v310
    %v567 = vunpack.c.l.b16 %v311
    %v568 = vunpack.c.l.b16 %v312
    %v569 = vunpack.c.l.b16 %v313
    %v570 = vunpack.c.l.b16 %v314
    %v571 = vunpack.c.l.b16 %v315
    %v572 = vunpack.c.l.b16 %v316
    %v573 = vunpack.c.l.b16 %v317
    %v574 = vunpack.c.l.b16 %v318
    %v575 = vunpack.c.l.b16 %v319
    %v576 = vunpack.c.l.b16 %v320
    %v577 = vunpack.c.l.b16 %v321
    %v578 = vunpack.c.l.b16 %v322
    %v579 = vunpack.c.l.b16 %v323
    %v580 = vunpack.c.l.b16 %v324
    %v581 = vunpack.c.l.b16 %v325
    %v582 = vunpack.c.l.b16 %v326
    %v583 = vunpack.c.l.b16 %v327
    %v584 = vunpack.c.l.b16 %v328
    %v585 = vunpack.c.l.b16 %v329
    %v586 = vunpack.c.l.b16 %v330
    %v587 = vunpack.c.l.b16 %v331
    %v588 = vunpack.c.l.b16 %v332
    %v589 = vunpack.c.l.b16 %v333
    %v590 = vunpack.c.l.b16 %v334
    %v591 = vunpack.c.l.b16 %v335
    %v592 = vunpack.c.l.b16 %v336
    %v593 = vunpack.c.l.b16 %v337
    %v594 = vunpack.c.l.b16 %v338
    %v595 = vunpack.c.l.b16 %v339
    %v596 = vunpack.c.l.b16 %v340
    %v597 = vunpack.c.l.b16 %v341
    %v598 = vunpack.c.l.b16 %v342
    %v599 = vunpack.c.l.b16 %v343
    %v600 = vunpack.c.l.b16 %v344
    %v601 = vunpack.c.l.b16 %v345
    %v602 = vunpack.c.l.b16 %v346
    %v603 = vunpack.c.l.b16 %v347
    %v604 = vunpack.c.l.b16 %v348
    %v605 = vunpack.c.l.b16 %v349
    %v606 = vunpack.c.l.b16 %v350
    %v607 = vunpack.c.l.b16 %v351
    %v608 = vunpack.c.l.b16 %v352
    %v609 = vunpack.c.l.b16 %v353
    %v610 = vunpack.c.l.b16 %v354
    %v611 = vunpack.c.l.b16 %v355
    %v612 = vunpack.c.l.b16 %v356
    %v613 = vunpack.c.l.b16 %v357
    %v614 = vunpack.c.l.b16 %v358
    %v615 = vunpack.c.l.b16 %v359
    %v616 = vunpack.c.l.b16 %v360
    %v617 = vunpack.c.l.b16 %v361
    %v618 = vunpack.c.l.b16 %v362
    %v619 = vunpack.c.l.b16 %v363
    %v620 = vunpack.c.l.b16 %v364
    %v621 = vunpack.c.l.b16 %v365
    %v622 = vunpack.c.l.b16 %v366
    %v623 = vunpack.c.l.b16 %v367
    %v624 = vunpack.c.l.b16 %v368
    %v625 = vunpack.c.l.b16 %v369
    %v626 = vunpack.c.l.b16 %v370
    %v627 = vunpack.c.l.b16 %v371
    %v628 = vunpack.c.l.b16 %v372
    %v629 = vunpack.c.l.b16 %v373
    %v630 = vunpack.c.l.b16 %v374
    %v631 = vunpack.c.l.b16 %v375
    %v632 = vunpack.c.l.b16 %v376
    %v633 = vunpack.c.l.b16 %v377
    %v634 = vunpack.c.l.b16 %v378
    %v635 = vunpack.c.l.b16 %v379
    %v636 = vunpack.c.l.b16 %v380
    %v637 = vunpack.c.l.b16 %v381
    %v638 = vunpack.c.l.b16 %v382
    %v639 = vunpack.c.l.b16 %v383
    %v640 = vunpack.c.l.b16 %v384
    %v641 = vunpack.c.l.b16 %v385
    %v642 = vunpack.c.l.b16 %v386
    %v643 = vunpack.c.l.b16 %v387
    %v644 = vunpack.c.l.b16 %v388
    %v645 = vunpack.c.l.b16 %v389
    %v646 = vunpack.c.l.b16 %v390
    %v647 = vunpack.c.l.b16 %v391
    %v648 = vunpack.c.l.b16 %v392
    %v649 = vunpack.c.l.b16 %v393
    %v650 = vunpack.c.l.b16 %v394
    %v651 = vunpack.c.l.b16 %v395
    %v652 = vunpack.c.l.b16 %v396
    %v653 = vunpack.c.l.b16 %v397
    %v654 = vunpack.c.l.b16 %v398
    %v655 = vpack.c.b16 %v528, %v527
    %v656 = vpack.c.b16 %v530, %v529
    %v657 = vpack.c.b16 %v532, %v531
    %v658 = vpack.c.b16 %v534, %v533
    %v659 = vpack.c.b16 %v536, %v535
    %v660 = vpack.c.b16 %v538, %v537
    %v661 = vpack.c.b16 %v540, %v539
    %v662 = vpack.c.b16 %v542, %v541
    %v663 = vpack.c.b16 %v544, %v543
    %v664 = vpack.c.b16 %v546, %v545
    %v665 = vpack.c.b16 %v548, %v547
    %v666 = vpack.c.b16 %v550, %v549
    %v667 = vpack.c.b16 %v552, %v551
    %v668 = vpack.c.b16 %v554, %v553
    %v669 = vpack.c.b16 %v556, %v555
    %v670 = vpack.c.b16 %v558, %v557
    %v671 = vpack.c.b16 %v560, %v559
    %v672 = vpack.c.b16 %v562, %v561
    %v673 = vpack.c.b16 %v564, %v563
    %v674 = vpack.c.b16 %v566, %v565
    %v675 = vpack.c.b16 %v568, %v567
    %v676 = vpack.c.b16 %v570, %v569
    %v677 = vpack.c.b16 %v572, %v571
    %v678 = vpack.c.b16 %v574, %v573
    %v679 = vpack.c.b16 %v576, %v575
    %v680 = vpack.c.b16 %v578, %v577
    %v681 = vpack.c.b16 %v580, %v579
    %v682 = vpack.c.b16 %v582, %v581
    %v683 = vpack.c.b16 %v584, %v583
    %v684 = vpack.c.b16 %v586, %v585
    %v685 = vpack.c.b16 %v588, %v587
    %v686 = vpack.c.b16 %v590, %v589
    %v687 = vpack.c.b16 %v592, %v591
    %v688 = vpack.c.b16 %v594, %v593
    %v689 = vpack.c.b16 %v596, %v595
    %v690 = vpack.c.b16 %v598, %v597
    %v691 = vpack.c.b16 %v600, %v599
    %v692 = vpack.c.b16 %v602, %v601
    %v693 = vpack.c.b16 %v604, %v603
    %v694 = vpack.c.b16 %v606, %v605
    %v695 = vpack.c.b16 %v608, %v607
    %v696 = vpack.c.b16 %v610, %v609
    %v697 = vpack.c.b16 %v612, %v611
    %v698 = vpack.c.b16 %v614, %v613
    %v699 = vpack.c.b16 %v616, %v615
    %v700 = vpack.c.b16 %v618, %v617
    %v701 = vpack.c.b16 %v620, %v619
    %v702 = vpack.c.b16 %v622, %v621
    %v703 = vpack.c.b16 %v624, %v623
    %v704 = vpack.c.b16 %v626, %v625
    %v705 = vpack.c.b16 %v628, %v627
    %v706 = vpack.c.b16 %v630, %v629
    %v707 = vpack.c.b16 %v632, %v631
    %v708 = vpack.c.b16 %v634, %v633
    %v709 = vpack.c.b16 %v636, %v635
    %v710 = vpack.c.b16 %v638, %v637
    %v711 = vpack.c.b16 %v640, %v639
    %v712 = vpack.c.b16 %v642, %v641
    %v713 = vpack.c.b16 %v644, %v643
    %v714 = vpack.c.b16 %v646, %v645
    %v715 = vpack.c.b16 %v648, %v647
    %v716 = vpack.c.b16 %v650, %v649
    %v717 = vpack.c.b16 %v652, %v651
    %v718 = vpack.c.b16 %v654, %v653
    %783 = vmatprep.subr.bf16.mxu0 0
    %784 = vmatpush1.bf16.msra.mxu0 %v655
    %785 = vmatprep.subr.bf16.mxu0 0
    %786 = vmatpush1.bf16.msra.mxu0 %v656
    %787 = vmatprep.subr.bf16.mxu0 0
    %788 = vmatpush1.bf16.msra.mxu0 %v657
    %789 = vmatprep.subr.bf16.mxu0 0
    %790 = vmatpush1.bf16.msra.mxu0 %v658
    %791 = vmatprep.subr.bf16.mxu0 0
    %792 = vmatpush1.bf16.msra.mxu0 %v659
    %793 = vmatprep.subr.bf16.mxu0 0
    %794 = vmatpush1.bf16.msra.mxu0 %v660
    %795 = vmatprep.subr.bf16.mxu0 0
    %796 = vmatpush1.bf16.msra.mxu0 %v661
    %797 = vmatprep.subr.bf16.mxu0 0
    %798 = vmatpush1.bf16.msra.mxu0 %v662
    %799 = vmatprep.subr.bf16.mxu0 0
    %800 = vmatpush1.bf16.msra.mxu0 %v663
    %801 = vmatprep.subr.bf16.mxu0 0
    %802 = vmatpush1.bf16.msra.mxu0 %v664
    %803 = vmatprep.subr.bf16.mxu0 0
    %804 = vmatpush1.bf16.msra.mxu0 %v665
    %805 = vmatprep.subr.bf16.mxu0 0
    %806 = vmatpush1.bf16.msra.mxu0 %v666
    %807 = vmatprep.subr.bf16.mxu0 0
    %808 = vmatpush1.bf16.msra.mxu0 %v667
    %809 = vmatprep.subr.bf16.mxu0 0
    %810 = vmatpush1.bf16.msra.mxu0 %v668
    %811 = vmatprep.subr.bf16.mxu0 0
    %812 = vmatpush1.bf16.msra.mxu0 %v669
    %813 = vmatprep.subr.bf16.mxu0 0
    %814 = vmatpush1.bf16.msra.mxu0 %v670
    %815 = vmatprep.mubr.bf16.mxu0 %v264
    %816 = vmatmul.mubr.bf16.gmra.mrb[0].mxu0 %v263
    %v817 = vpop.f32.mrb[0].mxu0
    %v818 = vadd.f32 0.0, %v817
    %v819 = vpop.f32.mrb[0].mxu0
    %v820 = vpop.f32.mrb[0].mxu0
    %v821 = vadd.f32 0.0, %v820
    %v822 = vpop.f32.mrb[0].mxu0
    %823 = vdwg.mxu0
    %824 = vmatprep.subr.bf16.mxu0 0
    %825 = vmatpush1.bf16.msra.mxu0 %v671
    %826 = vmatprep.subr.bf16.mxu0 0
    %827 = vmatpush1.bf16.msra.mxu0 %v672
    %828 = vmatprep.subr.bf16.mxu0 0
    %829 = vmatpush1.bf16.msra.mxu0 %v673
    %830 = vmatprep.subr.bf16.mxu0 0
    %831 = vmatpush1.bf16.msra.mxu0 %v674
    %832 = vmatprep.subr.bf16.mxu0 0
    %833 = vmatpush1.bf16.msra.mxu0 %v675
    %834 = vmatprep.subr.bf16.mxu0 0
    %835 = vmatpush1.bf16.msra.mxu0 %v676
    %836 = vmatprep.subr.bf16.mxu0 0
    %837 = vmatpush1.bf16.msra.mxu0 %v677
    %838 = vmatprep.subr.bf16.mxu0 0
    %839 = vmatpush1.bf16.msra.mxu0 %v678
    %840 = vmatprep.subr.bf16.mxu0 0
    %841 = vmatpush1.bf16.msra.mxu0 %v679
    %842 = vmatprep.subr.bf16.mxu0 0
    %843 = vmatpush1.bf16.msra.mxu0 %v680
    %844 = vmatprep.subr.bf16.mxu0 0
    %845 = vmatpush1.bf16.msra.mxu0 %v681
    %846 = vmatprep.subr.bf16.mxu0 0
    %847 = vmatpush1.bf16.msra.mxu0 %v682
    %848 = vmatprep.subr.bf16.mxu0 0
    %849 = vmatpush1.bf16.msra.mxu0 %v683
    %850 = vmatprep.subr.bf16.mxu0 0
    %851 = vmatpush1.bf16.msra.mxu0 %v684
    %852 = vmatprep.subr.bf16.mxu0 0
    %853 = vmatpush1.bf16.msra.mxu0 %v685
    %854 = vmatprep.subr.bf16.mxu0 0
    %855 = vmatpush1.bf16.msra.mxu0 %v686
    %856 = vmatprep.mubr.bf16.mxu0 %v266
    %857 = vmatmul.mubr.bf16.gmra.mrb[0].mxu0 %v265
    %v858 = vpop.f32.mrb[0].mxu0
    %v859 = vadd.f32 %v818, %v858
    %v860 = vpop.f32.mrb[0].mxu0
    %v861 = vpop.f32.mrb[0].mxu0
    %v862 = vadd.f32 %v821, %v861
    %v863 = vpop.f32.mrb[0].mxu0
    %864 = vdwg.mxu0
    %865 = vmatprep.subr.bf16.mxu0 0
    %866 = vmatpush1.bf16.msra.mxu0 %v687
    %867 = vmatprep.subr.bf16.mxu0 0
    %868 = vmatpush1.bf16.msra.mxu0 %v688
    %869 = vmatprep.subr.bf16.mxu0 0
    %870 = vmatpush1.bf16.msra.mxu0 %v689
    %871 = vmatprep.subr.bf16.mxu0 0
    %872 = vmatpush1.bf16.msra.mxu0 %v690
    %873 = vmatprep.subr.bf16.mxu0 0
    %874 = vmatpush1.bf16.msra.mxu0 %v691
    %875 = vmatprep.subr.bf16.mxu0 0
    %876 = vmatpush1.bf16.msra.mxu0 %v692
    %877 = vmatprep.subr.bf16.mxu0 0
    %878 = vmatpush1.bf16.msra.mxu0 %v693
    %879 = vmatprep.subr.bf16.mxu0 0
    %880 = vmatpush1.bf16.msra.mxu0 %v694
    %881 = vmatprep.subr.bf16.mxu0 0
    %882 = vmatpush1.bf16.msra.mxu0 %v695
    %883 = vmatprep.subr.bf16.mxu0 0
    %884 = vmatpush1.bf16.msra.mxu0 %v696
    %885 = vmatprep.subr.bf16.mxu0 0
    %886 = vmatpush1.bf16.msra.mxu0 %v697
    %887 = vmatprep.subr.bf16.mxu0 0
    %888 = vmatpush1.bf16.msra.mxu0 %v698
    %889 = vmatprep.subr.bf16.mxu0 0
    %890 = vmatpush1.bf16.msra.mxu0 %v699
    %891 = vmatprep.subr.bf16.mxu0 0
    %892 = vmatpush1.bf16.msra.mxu0 %v700
    %893 = vmatprep.subr.bf16.mxu0 0
    %894 = vmatpush1.bf16.msra.mxu0 %v701
    %895 = vmatprep.subr.bf16.mxu0 0
    %896 = vmatpush1.bf16.msra.mxu0 %v702
    %897 = vmatprep.mubr.bf16.mxu0 %v268
    %898 = vmatmul.mubr.bf16.gmra.mrb[0].mxu0 %v267
    %v899 = vpop.f32.mrb[0].mxu0
    %v900 = vadd.f32 %v859, %v899
    %v901 = vpop.f32.mrb[0].mxu0
    %v902 = vpop.f32.mrb[0].mxu0
    %v903 = vadd.f32 %v862, %v902
    %v904 = vpop.f32.mrb[0].mxu0
    %905 = vdwg.mxu0
    %906 = vmatprep.subr.bf16.mxu0 0
    %907 = vmatpush1.bf16.msra.mxu0 %v703
    %908 = vmatprep.subr.bf16.mxu0 0
    %909 = vmatpush1.bf16.msra.mxu0 %v704
    %910 = vmatprep.subr.bf16.mxu0 0
    %911 = vmatpush1.bf16.msra.mxu0 %v705
    %912 = vmatprep.subr.bf16.mxu0 0
    %913 = vmatpush1.bf16.msra.mxu0 %v706
    %914 = vmatprep.subr.bf16.mxu0 0
    %915 = vmatpush1.bf16.msra.mxu0 %v707
    %916 = vmatprep.subr.bf16.mxu0 0
    %917 = vmatpush1.bf16.msra.mxu0 %v708
    %918 = vmatprep.subr.bf16.mxu0 0
    %919 = vmatpush1.bf16.msra.mxu0 %v709
    %920 = vmatprep.subr.bf16.mxu0 0
    %921 = vmatpush1.bf16.msra.mxu0 %v710
    %922 = vmatprep.subr.bf16.mxu0 0
    %923 = vmatpush1.bf16.msra.mxu0 %v711
    %924 = vmatprep.subr.bf16.mxu0 0
    %925 = vmatpush1.bf16.msra.mxu0 %v712
    %926 = vmatprep.subr.bf16.mxu0 0
    %927 = vmatpush1.bf16.msra.mxu0 %v713
    %928 = vmatprep.subr.bf16.mxu0 0
    %929 = vmatpush1.bf16.msra.mxu0 %v714
    %930 = vmatprep.subr.bf16.mxu0 0
    %931 = vmatpush1.bf16.msra.mxu0 %v715
    %932 = vmatprep.subr.bf16.mxu0 0
    %933 = vmatpush1.bf16.msra.mxu0 %v716
    %934 = vmatprep.subr.bf16.mxu0 0
    %935 = vmatpush1.bf16.msra.mxu0 %v717
    %936 = vmatprep.subr.bf16.mxu0 0
    %937 = vmatpush1.bf16.msra.mxu0 %v718
    %938 = vmatprep.mubr.bf16.mxu0 %v270
    %939 = vmatmul.mubr.bf16.gmra.mrb[0].mxu0 %v269
    %v940 = vpop.f32.mrb[0].mxu0
    %v941 = vadd.f32 %v900, %v940
    %v942 = vpop.f32.mrb[0].mxu0
    %v943 = vpop.f32.mrb[0].mxu0
    %v944 = vadd.f32 %v903, %v943
    %v945 = vpop.f32.mrb[0].mxu0
    %946 = vdwg.mxu0
    %v947 = vadd.f32 %v69, %v941
    %v948 = vadd.f32 %v70, %v944
    %949 = vst [vmem:[#allocation2] sm:$0xff] %v947
    %950 = vst [vmem:[#allocation2 + $0x8] sm:$0xff] %v948
    // Predicated region
    $region38: #{tpu_custom_call.1} parent=1 // pred_check
      %p951 = pneg %p63
    $region39: #{tpu_custom_call.1} parent=1 // pred_check_branch
      %953 = sbr.rel (%p951) target = $region41
    $region40: #{tpu_custom_call.1} parent=1 // pred_region
      %v954 = vld [vmem:[#allocation2] sm:$0xff]
      %v955 = vld [vmem:[#allocation2 + $0x8] sm:$0xff]
      %v956 = vld [vmem:[%s2] sm:$0x1]
      %v958 = vlaneseq
      %v959 = vshrl.u32 %v958, 7
      %v960 = vsub.s32 0, %v959
      %v961 = vrot.slane %v956, %v960
      %v963 = vadd.f32 %v954, %v961
      %v964 = vadd.f32 %v955, %v961
      %v965 = vmax.f32 %v963, 0.0
      %v966 = vmax.f32 %v964, 0.0
      %v967 = vpack.c.bf16 %v966, %v965
      %v968 = vld [vmem:[#allocation8] sm:$0xf]
      %v969 = vld [vmem:[#allocation8 + $0x4] sm:$0xf]
      %v970 = vld [vmem:[#allocation8 + $0x8] sm:$0xf]
      %v971 = vld [vmem:[#allocation8 + $0xc] sm:$0xf]
      %v972 = vld [vmem:[#allocation8 + $0x10] sm:$0xf]
      %v973 = vld [vmem:[#allocation8 + $0x14] sm:$0xf]
      %v974 = vld [vmem:[#allocation8 + $0x18] sm:$0xf]
      %v975 = vld [vmem:[#allocation8 + $0x1c] sm:$0xf]
      %v976 = vld [vmem:[#allocation8 + $0x20] sm:$0xf]
      %v977 = vld [vmem:[#allocation8 + $0x24] sm:$0xf]
      %v978 = vld [vmem:[#allocation8 + $0x28] sm:$0xf]
      %v979 = vld [vmem:[#allocation8 + $0x2c] sm:$0xf]
      %v980 = vld [vmem:[#allocation8 + $0x30] sm:$0xf]
      %v981 = vld [vmem:[#allocation8 + $0x34] sm:$0xf]
      %v982 = vld [vmem:[#allocation8 + $0x38] sm:$0xf]
      %v983 = vld [vmem:[#allocation8 + $0x3c] sm:$0xf]
      %v984 = vld [vmem:[%s4] sm:$0x1]
      %v986 = vlaneseq
      %v987 = vshrl.u32 %v986, 7
      %v988 = vsub.s32 0, %v987
      %v989 = vrot.slane %v984, %v988
      %v1007 = vunpack.c.l.b16 %v968
      %v1008 = vunpack.c.l.b16 %v969
      %v1009 = vunpack.c.l.b16 %v970
      %v1010 = vunpack.c.l.b16 %v971
      %v1011 = vunpack.c.l.b16 %v972
      %v1012 = vunpack.c.l.b16 %v973
      %v1013 = vunpack.c.l.b16 %v974
      %v1014 = vunpack.c.l.b16 %v975
      %v1015 = vunpack.c.l.b16 %v976
      %v1016 = vunpack.c.l.b16 %v977
      %v1017 = vunpack.c.l.b16 %v978
      %v1018 = vunpack.c.l.b16 %v979
      %v1019 = vunpack.c.l.b16 %v980
      %v1020 = vunpack.c.l.b16 %v981
      %v1021 = vunpack.c.l.b16 %v982
      %v1022 = vunpack.c.l.b16 %v983
      %v1023 = vpack.c.b16 %v1008, %v1007
      %v1024 = vpack.c.b16 %v1010, %v1009
      %v1025 = vpack.c.b16 %v1012, %v1011
      %v1026 = vpack.c.b16 %v1014, %v1013
      %v1027 = vpack.c.b16 %v1016, %v1015
      %v1028 = vpack.c.b16 %v1018, %v1017
      %v1029 = vpack.c.b16 %v1020, %v1019
      %v1030 = vpack.c.b16 %v1022, %v1021
      %1039 = vmatprep.subr.bf16.mxu0 0
      %1040 = vmatpush1.bf16.msra.mxu0 %v1023
      %1041 = vmatprep.subr.bf16.mxu0 0
      %1042 = vmatpush1.bf16.msra.mxu0 %v1024
      %1043 = vmatprep.subr.bf16.mxu0 0
      %1044 = vmatpush1.bf16.msra.mxu0 %v1025
      %1045 = vmatprep.subr.bf16.mxu0 0
      %1046 = vmatpush1.bf16.msra.mxu0 %v1026
      %1047 = vmatprep.subr.bf16.mxu0 0
      %1048 = vmatpush1.bf16.msra.mxu0 %v1027
      %1049 = vmatprep.subr.bf16.mxu0 0
      %1050 = vmatpush1.bf16.msra.mxu0 %v1028
      %1051 = vmatprep.subr.bf16.mxu0 0
      %1052 = vmatpush1.bf16.msra.mxu0 %v1029
      %1053 = vmatprep.subr.bf16.mxu0 0
      %1054 = vmatpush1.bf16.msra.mxu0 %v1030
      %1055 = vmatprep.subr.bf16.mxu0 0
      %1056 = vmatpush1.bf16.msra.mxu0 0
      %1057 = vmatprep.subr.bf16.mxu0 0
      %1058 = vmatpush1.bf16.msra.mxu0 0
      %1059 = vmatprep.subr.bf16.mxu0 0
      %1060 = vmatpush1.bf16.msra.mxu0 0
      %1061 = vmatprep.subr.bf16.mxu0 0
      %1062 = vmatpush1.bf16.msra.mxu0 0
      %1063 = vmatprep.subr.bf16.mxu0 0
      %1064 = vmatpush1.bf16.msra.mxu0 0
      %1065 = vmatprep.subr.bf16.mxu0 0
      %1066 = vmatpush1.bf16.msra.mxu0 0
      %1067 = vmatprep.subr.bf16.mxu0 0
      %1068 = vmatpush1.bf16.msra.mxu0 0
      %1069 = vmatprep.subr.bf16.mxu0 0
      %1070 = vmatpush1.bf16.msra.mxu0 0
      %1071 = vmatprep.mubr.bf16.mxu0 0
      %1072 = vmatmul.mubr.bf16.gmra.mrb[0].mxu0 %v967
      %v1073 = vpop.f32.mrb[0].mxu0
      %v1074 = vadd.f32 %v989, %v1073
      %v1075 = vpop.f32.mrb[0].mxu0
      %v1076 = vpop.f32.mrb[0].mxu0
      %v1077 = vadd.f32 %v989, %v1076
      %v1078 = vpop.f32.mrb[0].mxu0
      %1079 = vdwg.mxu0
      %1080 = vmax.xlane.f32.xlu0 %v1074
      %v1081 = vpop.xlane.xlu0 %1080
      %1082 = vmax.xlane.f32.xlu0 %v1077
      %v1083 = vpop.xlane.xlu0 %1082
      %v1084 = vsub.f32 %v1074, %v1081
      %v1085 = vsub.f32 %v1077, %v1083
      %v1086 = vmul.f32 %v1084, 1.442695
      %v1087 = vpow.pop %v1086
      %v1088 = vmul.f32 %v1085, 1.442695
      %v1089 = vpow.pop %v1088
      %1090 = vadd.xlane.f32.xlu0 %v1087
      %v1091 = vpop.xlane.xlu0 %1090
      %1092 = vadd.xlane.f32.xlu0 %v1089
      %v1093 = vpop.xlane.xlu0 %1092
      %v1094 = vrcp.pop %v1091
      %v1095 = vmul.f32 %v1087, %v1094
      %v1096 = vrcp.pop %v1093
      %v1097 = vmul.f32 %v1089, %v1096
      %1098 = vst [vmem:[#allocation9] sm:$0xff] %v1095
      %1099 = vst [vmem:[#allocation9 + $0x8] sm:$0xff] %v1097
    $region41: #{tpu_custom_call.1} parent=1 // pred_fallthru
      _
    // Predicated region
    $region42: #{tpu_custom_call.1} parent=1 // pred_check
      _
    $region43: #{tpu_custom_call.1} parent=1 // pred_check_branch
      %1101 = sbr.rel (0) target = $region45
    $region44: #{tpu_custom_call.1} parent=1 // pred_region
      %s1103 = ssub.s32 256, 32
      %1104 = vsyncadd [#allocation5], %s1103
      %s1105 = sshll.u32 [#allocation9], 4
      %s1106 = int_to_ptr.vmem [resolvable:$true] %s1105
      %1111 = dma.vmem_to_hbm [thread:$0]  %s1106, 32, %s5, [#allocation5], 32, 32, 2
    $region45: #{tpu_custom_call.1} parent=1 // pred_fallthru
      _
    // Predicated region
    $region46: #{tpu_custom_call.1} parent=1 // pred_check
      _
    $region47: #{tpu_custom_call.1} parent=1 // pred_check_branch
      %1113 = sbr.rel (0) target = $region49
    $region48: #{tpu_custom_call.1} parent=1 // pred_region
      %1114 = dma.done [#allocation5], 256
    $region49: #{tpu_custom_call.1} parent=1 // pred_fallthru
      _
    %1115 = vsyncpa [#allocation4], 1
    %1116 = vsyncpa [#allocation7], 1
    %1117 = vsyncpa [#allocation5], 1

</llo_original>
